<compile_context>
chip_gen: v5e
topology: v5e:2x2
jax: 0.10.0
libtpu: 0.0.40
codegen_flags: <defaults>
</compile_context>

<pallas_src>
import functools

import jax
import jax.numpy as jnp
import numpy as np
from jax.experimental import pallas as pl
from jax.experimental.pallas import tpu as pltpu


def _round_up(x, m):
    return (x + m - 1) // m * m


def make_convnet_kernel(b_tile, l_pad, max_fsize, embed_dim):
    kc = max_fsize * embed_dim

    def kernel(e_ref, wconv_ref, bconv_ref, mask_ref,
               fcw_ref, shift_ref, out_ref):
        x = e_ref[...]                                   # [b_tile, s_pad, E]

        # im2col: window(t) = concat_k x[:, t+k, :]; one fused conv matmul for
        # all filter sizes (K = max_fsize*E, N = NF_pad, M = b_tile*l_pad).
        pieces = [x[:, k:k + l_pad, :] for k in range(max_fsize)]
        slab = jnp.concatenate(pieces, axis=-1)          # [b_tile, l_pad, kc]
        slab = slab.reshape(b_tile * l_pad, kc)

        conv = jnp.dot(slab, wconv_ref[...],
                       preferred_element_type=jnp.float32)   # [b_tile*l_pad, nf_pad]
        conv = jnp.maximum(conv + bconv_ref[...], 0.0)        # bias + ReLU
        nf_pad = conv.shape[-1]
        conv = conv.reshape(b_tile, l_pad, nf_pad)
        # Zero out time positions invalid for a given filter size (ReLU >= 0,
        # so zeros never win the max over the valid positions).
        conv = conv * mask_ref[...][None, :, :]
        pooled = jnp.max(conv, axis=1)                        # [b_tile, nf_pad]

        # dropout: eval mode -> identity.
        # FC with eval-mode BatchNorm folded into the weight; fc bias + BN
        # shift folded into a single shift vector (padded columns = -1e30 so
        # softmax ignores them).
        logits = jnp.dot(pooled, fcw_ref[...],
                         preferred_element_type=jnp.float32) + shift_ref[...]

        m = jnp.max(logits, axis=1, keepdims=True)
        p = jnp.exp(logits - m)
        denom = jnp.sum(p, axis=1, keepdims=True)
        probs = p * pl.reciprocal(denom, approx=True)
        out_ref[...] = probs.astype(out_ref.dtype)

    return kernel


def convnet_forward(text, params, *, filter_sizes, b_tile=128,
                    compute_dtype=jnp.float32):
    """text: int32 [seq_len, batch]  ->  probs float32 [batch, output_dim]."""
    emb_table = params["embedding"]             # pad row already zeroed at init
    seq_len, batch = text.shape
    _, embed_dim = emb_table.shape
    filter_sizes = tuple(filter_sizes)
    n_conv = len(filter_sizes)
    n_filters = params["conv_b"][0].shape[-1]
    output_dim = params["fc_b"].shape[-1]
    max_fsize = max(filter_sizes)
    min_fsize = min(filter_sizes)

    nf_total = n_filters * n_conv
    nf_pad = _round_up(nf_total, 128)
    out_pad = _round_up(output_dim, 128)
    kc = max_fsize * embed_dim

    l_pad = _round_up(seq_len - min_fsize + 1, 8)            # pooled time axis
    s_pad = _round_up(max(seq_len, l_pad + max_fsize - 1), 8)

    # ---- batch tile, capped against a conservative VMEM budget (v7x: 64 MiB
    # physical / 32 MiB scoped; keep double-buffered activations <= 8 MiB) ----
    row_bytes = s_pad * embed_dim * jnp.dtype(compute_dtype).itemsize
    b_tile = min(b_tile, _round_up(batch, 8))
    while b_tile > 8 and 2 * b_tile * row_bytes > 8 * 1024 * 1024:
        b_tile = _round_up(b_tile // 2, 8)
    batch_pad = _round_up(batch, b_tile)

    # ---- glue: embedding gather directly in [batch, seq, E] order ----
    # TODO(synk): fuse the gather into the kernel (scalar-prefetched token ids
    # + manual DMA from the HBM table) to skip one HBM round trip.
    embed = emb_table[text.T].astype(compute_dtype)          # [batch, seq, E]
    embed = jnp.pad(embed,
                    ((0, batch_pad - batch), (0, s_pad - seq_len), (0, 0)))

    # ---- pack all conv branches into one [kc, nf_pad] weight / bias ----
    wconv = jnp.zeros((kc, nf_pad), jnp.float32)
    bconv = jnp.zeros((1, nf_pad), jnp.float32)
    for i, fs in enumerate(filter_sizes):
        wconv = wconv.at[:fs * embed_dim,
                         i * n_filters:(i + 1) * n_filters].set(params["conv_w"][i])
        bconv = bconv.at[:, i * n_filters:(i + 1) * n_filters].set(params["conv_b"][i])
    wconv = wconv.astype(compute_dtype)

    # validity mask over (time position, packed filter column)
    col_len = np.zeros((nf_pad,), np.int32)
    for i, fs in enumerate(filter_sizes):
        col_len[i * n_filters:(i + 1) * n_filters] = seq_len - fs + 1
    mask = jnp.asarray(
        (np.arange(l_pad)[:, None] < col_len[None, :]).astype(np.float32))

    # FC with eval-mode BN folded in, padded to 128 lanes; dead output columns
    # get weight=0 / shift=-1e30 so they vanish under softmax.
    fcw_fused = params["fc_w"] * params["bn_scale"]                  # [nf_total, out]
    shift_fused = params["fc_b"] * params["bn_scale"] + params["bn_shift"]
    fcw = jnp.zeros((nf_pad, out_pad), jnp.float32)
    fcw = fcw.at[:nf_total, :output_dim].set(fcw_fused).astype(compute_dtype)
    shift = jnp.full((1, out_pad), -1e30, jnp.float32).at[:, :output_dim].set(
        shift_fused)

    kernel = make_convnet_kernel(b_tile, l_pad, max_fsize, embed_dim)

    in_specs = [
        pl.BlockSpec((b_tile, s_pad, embed_dim), lambda b: (b, 0, 0)),  # embed
        pl.BlockSpec((kc, nf_pad), lambda b: (0, 0)),                   # conv w
        pl.BlockSpec((1, nf_pad), lambda b: (0, 0)),                    # conv b
        pl.BlockSpec((l_pad, nf_pad), lambda b: (0, 0)),                # mask
        pl.BlockSpec((nf_pad, out_pad), lambda b: (0, 0)),              # fc w (BN-folded)
        pl.BlockSpec((1, out_pad), lambda b: (0, 0)),                   # shift (bias+BN)
    ]

    out = pl.pallas_call(
        kernel,
        out_shape=jax.ShapeDtypeStruct((batch_pad, out_pad), jnp.float32),
        grid_spec=pltpu.PrefetchScalarGridSpec(
            num_scalar_prefetch=0,
            grid=(batch_pad // b_tile,),
            in_specs=in_specs,
            out_specs=pl.BlockSpec((b_tile, out_pad), lambda b: (b, 0)),
        ),
        compiler_params=pltpu.CompilerParams(
            dimension_semantics=("parallel",)),
    )(embed, wconv, bconv, mask, fcw, shift)

    return out[:batch, :output_dim]


def init_params(key, *, vocab_size, embedding_dim, n_filters, filter_sizes,
                output_dim, pad_idx):
    keys = jax.random.split(key, 4 + 2 * len(filter_sizes))
    params = {}
    emb = jax.random.normal(keys[0], (vocab_size, embedding_dim), jnp.float32) * 0.1
    # padding_idx row is zero (done once here, not per forward call)
    params["embedding"] = emb.at[pad_idx].set(0.0)

    conv_w, conv_b = [], []
    for i, fsize in enumerate(filter_sizes):
        # PyTorch conv weight is [n_filters, 1, fsize, E]; stored here already
        # reshaped/transposed to [fsize*E, n_filters] for the matmul form.
        w = jax.random.normal(
            keys[1 + 2 * i], (fsize * embedding_dim, n_filters), jnp.float32) * 0.05
        b = jax.random.normal(keys[2 + 2 * i], (1, n_filters), jnp.float32) * 0.05
        conv_w.append(w)
        conv_b.append(b)
    params["conv_w"] = conv_w
    params["conv_b"] = conv_b

    total = n_filters * len(filter_sizes)
    params["fc_w"] = jax.random.normal(
        keys[-3], (total, output_dim), jnp.float32) * 0.1
    params["fc_b"] = jax.random.normal(keys[-2], (1, output_dim), jnp.float32) * 0.1

    # Eval-mode BatchNorm1d: gamma=1, beta=0, deterministic running stats.
    running_mean = jnp.linspace(-0.1, 0.1, output_dim, dtype=jnp.float32)[None, :]
    running_var = jnp.linspace(0.8, 1.2, output_dim, dtype=jnp.float32)[None, :]
    gamma = jnp.ones((1, output_dim), jnp.float32)
    beta = jnp.zeros((1, output_dim), jnp.float32)
    eps = 1e-5
    scale = gamma / jnp.sqrt(running_var + eps)
    shift = beta - running_mean * scale
    params["bn_scale"] = scale
    params["bn_shift"] = shift
    return params


def reference_forward(text, params, *, filter_sizes):
    """Pure-JAX reference of the PyTorch forward (eval mode)."""
    seq_len, batch = text.shape
    embed_dim = params["embedding"].shape[1]
    embed = params["embedding"][text.T]                      # [batch, seq, E]
    pooled = []
    for i, fs in enumerate(filter_sizes):
        L = seq_len - fs + 1
        windows = jnp.stack(
            [embed[:, t:t + fs, :].reshape(batch, fs * embed_dim)
             for t in range(L)], axis=1)                     # [batch, L, fs*E]
        conv = jnp.einsum("blk,kn->bln", windows, params["conv_w"][i])
        conv = jnp.maximum(conv + params["conv_b"][i][None], 0.0)
        pooled.append(jnp.max(conv, axis=1))                 # [batch, n_filters]
    cat = jnp.concatenate(pooled, axis=1)
    logits = cat @ params["fc_w"] + params["fc_b"]
    logits = logits * params["bn_scale"] + params["bn_shift"]
    return jax.nn.softmax(logits, axis=-1)


if __name__ == "__main__":
    # Small, module-consistent shapes.
    vocab_size = 50
    embedding_dim = 32
    n_filters = 8
    filter_sizes = (2, 3, 4)
    output_dim = 4
    pad_idx = 0
    seq_len = 8
    batch = 2

    key = jax.random.PRNGKey(0)
    pkey, tkey = jax.random.split(key)
    params = init_params(
        pkey, vocab_size=vocab_size, embedding_dim=embedding_dim,
        n_filters=n_filters, filter_sizes=filter_sizes, output_dim=output_dim,
        pad_idx=pad_idx)

    # text: [seq_len, batch] int token ids (some pad tokens included)
    text = jax.random.randint(tkey, (seq_len, batch), 0, vocab_size, jnp.int32)
    text = text.at[0, 0].set(pad_idx)

    fwd = jax.jit(functools.partial(convnet_forward, filter_sizes=filter_sizes))
    probs = jax.block_until_ready(fwd(text, params))
    ref = reference_forward(text, params, filter_sizes=filter_sizes)

    assert probs.shape == (batch, output_dim)
    assert bool(jnp.all(jnp.isfinite(probs)))
    assert bool(jnp.allclose(jnp.sum(probs, axis=1), 1.0, atol=5e-3))
    assert bool(jnp.allclose(probs, ref, atol=5e-3))
    print("KERNEL_OK")
</pallas_src>

<mosaic_0001>
module attributes {stable_mosaic.version = 11 : i64} {
  func.func @kernel(%arg0: i32, %arg1: memref<8x16x32xf32, #tpu.memory_space<vmem>>, %arg2: memref<128x128xf32, #tpu.memory_space<vmem>>, %arg3: memref<1x128xf32, #tpu.memory_space<vmem>>, %arg4: memref<8x128xf32, #tpu.memory_space<vmem>>, %arg5: memref<128x128xf32, #tpu.memory_space<vmem>>, %arg6: memref<1x128xf32, #tpu.memory_space<vmem>>, %arg7: memref<8x128xf32, #tpu.memory_space<vmem>>) attributes {dimension_semantics = [#tpu.dimension_semantics<parallel>], iteration_bounds = array<i64: 1>, scalar_prefetch = 0 : i64, scratch_operands = 0 : i64, tpu.core_type = #tpu.core_type<tc>, window_params = [{transform_indices = @transform_0, window_bounds = array<i64: 8, 16, 32>}, {pipeline_mode = #tpu.pipeline_mode<synchronous>, transform_indices = @transform_1, window_bounds = array<i64: 128, 128>}, {pipeline_mode = #tpu.pipeline_mode<synchronous>, transform_indices = @transform_2, window_bounds = array<i64: 1, 128>}, {pipeline_mode = #tpu.pipeline_mode<synchronous>, transform_indices = @transform_3, window_bounds = array<i64: 8, 128>}, {pipeline_mode = #tpu.pipeline_mode<synchronous>, transform_indices = @transform_4, window_bounds = array<i64: 128, 128>}, {pipeline_mode = #tpu.pipeline_mode<synchronous>, transform_indices = @transform_5, window_bounds = array<i64: 1, 128>}, {transform_indices = @transform_6, window_bounds = array<i64: 8, 128>}]} {
    %c0 = arith.constant 0 : index
    %c0_0 = arith.constant 0 : index
    %c0_1 = arith.constant 0 : index
    %0 = vector.load %arg1[%c0, %c0_0, %c0_1] : memref<8x16x32xf32, #tpu.memory_space<vmem>>, vector<8x16x32xf32>
    %1 = vector.extract_strided_slice %0 {offsets = [0, 0, 0], sizes = [8, 8, 32], strides = [1, 1, 1]} : vector<8x16x32xf32> to vector<8x8x32xf32>
    %2 = vector.extract_strided_slice %0 {offsets = [0, 1, 0], sizes = [8, 8, 32], strides = [1, 1, 1]} : vector<8x16x32xf32> to vector<8x8x32xf32>
    %3 = vector.extract_strided_slice %0 {offsets = [0, 2, 0], sizes = [8, 8, 32], strides = [1, 1, 1]} : vector<8x16x32xf32> to vector<8x8x32xf32>
    %4 = vector.extract_strided_slice %0 {offsets = [0, 3, 0], sizes = [8, 8, 32], strides = [1, 1, 1]} : vector<8x16x32xf32> to vector<8x8x32xf32>
    %5 = tpu.concatenate %1, %2, %3, %4 in 2 : vector<8x8x32xf32>, vector<8x8x32xf32>, vector<8x8x32xf32>, vector<8x8x32xf32> -> vector<8x8x128xf32>
    %6 = vector.shape_cast %5 : vector<8x8x128xf32> to vector<64x128xf32>
    %c0_2 = arith.constant 0 : index
    %c0_3 = arith.constant 0 : index
    %7 = vector.load %arg2[%c0_2, %c0_3] : memref<128x128xf32, #tpu.memory_space<vmem>>, vector<128x128xf32>
    %cst = arith.constant dense<0.000000e+00> : vector<64x128xf32>
    %8 = tpu.matmul %6, %7, %cst {dimension_numbers = #tpu.dot_dimension_numbers<[1], [0], [0], [1], [0, 0, 1, 1], [], []>} : vector<64x128xf32>, vector<128x128xf32>, vector<64x128xf32> -> vector<64x128xf32>
    %c0_4 = arith.constant 0 : index
    %c0_5 = arith.constant 0 : index
    %9 = vector.load %arg3[%c0_4, %c0_5] : memref<1x128xf32, #tpu.memory_space<vmem>>, vector<1x128xf32>
    %10 = vector.broadcast %9 : vector<1x128xf32> to vector<64x128xf32>
    %11 = arith.addf %8, %10 : vector<64x128xf32>
    %cst_6 = arith.constant 0.000000e+00 : f32
    %12 = vector.broadcast %cst_6 : f32 to vector<64x128xf32>
    %13 = arith.maximumf %11, %12 : vector<64x128xf32>
    %14 = vector.shape_cast %13 : vector<64x128xf32> to vector<8x8x128xf32>
    %c0_7 = arith.constant 0 : index
    %c0_8 = arith.constant 0 : index
    %15 = vector.load %arg4[%c0_7, %c0_8] : memref<8x128xf32, #tpu.memory_space<vmem>>, vector<8x128xf32>
    %16 = vector.shape_cast %15 : vector<8x128xf32> to vector<1x8x128xf32>
    %17 = vector.broadcast %16 : vector<1x8x128xf32> to vector<8x8x128xf32>
    %18 = arith.mulf %14, %17 : vector<8x8x128xf32>
    %cst_9 = arith.constant dense<0xFF800000> : vector<8x128xf32>
    %19 = vector.multi_reduction <maximumf>, %18, %cst_9 [1] : vector<8x8x128xf32> to vector<8x128xf32>
    %c0_10 = arith.constant 0 : index
    %c0_11 = arith.constant 0 : index
    %20 = vector.load %arg5[%c0_10, %c0_11] : memref<128x128xf32, #tpu.memory_space<vmem>>, vector<128x128xf32>
    %cst_12 = arith.constant dense<0.000000e+00> : vector<8x128xf32>
    %21 = tpu.matmul %19, %20, %cst_12 {dimension_numbers = #tpu.dot_dimension_numbers<[1], [0], [0], [1], [0, 0, 1, 1], [], []>} : vector<8x128xf32>, vector<128x128xf32>, vector<8x128xf32> -> vector<8x128xf32>
    %c0_13 = arith.constant 0 : index
    %c0_14 = arith.constant 0 : index
    %22 = vector.load %arg6[%c0_13, %c0_14] : memref<1x128xf32, #tpu.memory_space<vmem>>, vector<1x128xf32>
    %23 = vector.broadcast %22 : vector<1x128xf32> to vector<8x128xf32>
    %24 = arith.addf %21, %23 : vector<8x128xf32>
    %cst_15 = arith.constant dense<0xFF800000> : vector<8xf32>
    %25 = vector.multi_reduction <maximumf>, %24, %cst_15 [1] : vector<8x128xf32> to vector<8xf32>
    %26 = vector.shape_cast %25 : vector<8xf32> to vector<8x1xf32>
    %27 = vector.broadcast %26 : vector<8x1xf32> to vector<8x128xf32>
    %28 = arith.subf %24, %27 : vector<8x128xf32>
    %29 = math.exp %28 : vector<8x128xf32>
    %cst_16 = arith.constant dense<0.000000e+00> : vector<8xf32>
    %30 = vector.multi_reduction <add>, %29, %cst_16 [1] : vector<8x128xf32> to vector<8xf32>
    %31 = vector.shape_cast %30 : vector<8xf32> to vector<8x1xf32>
    %32 = tpu.reciprocal %31 {approx = true} : vector<8x1xf32> -> vector<8x1xf32>
    %33 = vector.broadcast %32 : vector<8x1xf32> to vector<8x128xf32>
    %34 = arith.mulf %29, %33 : vector<8x128xf32>
    %c0_17 = arith.constant 0 : index
    %c0_18 = arith.constant 0 : index
    %35 = vector.load %arg7[%c0_17, %c0_18] : memref<8x128xf32, #tpu.memory_space<vmem>>, vector<8x128xf32>
    tpu.vector_store %arg7[%c0_17, %c0_18], %34 {strides = array<i32>} : memref<8x128xf32, #tpu.memory_space<vmem>>, vector<8x128xf32>,
    return
  }
  func.func @transform_0(%arg0: i32) -> (i32, i32, i32) {
    %c0_i32 = arith.constant 0 : i32
    %c0_i32_0 = arith.constant 0 : i32
    %c0_i32_1 = arith.constant 0 : i32
    return %arg0, %c0_i32, %c0_i32_0 : i32, i32, i32
  }
  func.func @transform_1(%arg0: i32) -> (i32, i32) {
    %c0_i32 = arith.constant 0 : i32
    %c0_i32_0 = arith.constant 0 : i32
    %c0_i32_1 = arith.constant 0 : i32
    return %c0_i32, %c0_i32_0 : i32, i32
  }
  func.func @transform_2(%arg0: i32) -> (i32, i32) {
    %c0_i32 = arith.constant 0 : i32
    %c0_i32_0 = arith.constant 0 : i32
    %c0_i32_1 = arith.constant 0 : i32
    return %c0_i32, %c0_i32_0 : i32, i32
  }
  func.func @transform_3(%arg0: i32) -> (i32, i32) {
    %c0_i32 = arith.constant 0 : i32
    %c0_i32_0 = arith.constant 0 : i32
    %c0_i32_1 = arith.constant 0 : i32
    return %c0_i32, %c0_i32_0 : i32, i32
  }
  func.func @transform_4(%arg0: i32) -> (i32, i32) {
    %c0_i32 = arith.constant 0 : i32
    %c0_i32_0 = arith.constant 0 : i32
    %c0_i32_1 = arith.constant 0 : i32
    return %c0_i32, %c0_i32_0 : i32, i32
  }
  func.func @transform_5(%arg0: i32) -> (i32, i32) {
    %c0_i32 = arith.constant 0 : i32
    %c0_i32_0 = arith.constant 0 : i32
    %c0_i32_1 = arith.constant 0 : i32
    return %c0_i32, %c0_i32_0 : i32, i32
  }
  func.func @transform_6(%arg0: i32) -> (i32, i32) {
    %c0_i32 = arith.constant 0 : i32
    %c0_i32_0 = arith.constant 0 : i32
    return %arg0, %c0_i32 : i32, i32
  }
}

</mosaic_0001>

<llo_original>
// kernel: convnet_forward.1
$region0: #{convnet_forward.1}
  #allocation0 [shape = 'u32[]', space=smem, size = 0x4, offset = 0x4, fixed_abs, tag = 'smem constant byte address 0x4 - core index']
  #allocation1 [shape = 'u32[72,128]{1,0:T(1,128)}', space=vmem, size = 0x9000, scoped, tag = 'internal scratch']
  %s0 = inlined_call_operand.vmem [shape: f32[8,16,32], index: 0, kind: input, shape index: {}]
  %s1 = inlined_call_operand.vmem [shape: f32[128,128], index: 1, kind: input, shape index: {}]
  %s2 = inlined_call_operand.vmem [shape: f32[1,128], index: 2, kind: input, shape index: {}]
  %s3 = inlined_call_operand.vmem [shape: f32[8,128], index: 3, kind: input, shape index: {}]
  %s4 = inlined_call_operand.vmem [shape: f32[128,128], index: 4, kind: input, shape index: {}]
  %s5 = inlined_call_operand.vmem [shape: f32[1,128], index: 5, kind: input, shape index: {}]
  %s6 = inlined_call_operand.vmem [shape: f32[8,128], index: 6, kind: output, shape index: {}]
  %s7 = sld [smem:[#allocation0]]
  $region34: #{convnet_forward.1} parent=0
    _
  %s9 = ssub.s32 1, %s7
  %s10 = scalar_select 0, %s9, %s7
  // Predicated region
  $region2: #{convnet_forward.1} parent=0 // pred_check
    _
  $region3: #{convnet_forward.1} parent=0 // pred_check_branch
    %12 = sbr.rel (0) target = $region5
  $region4: #{convnet_forward.1} parent=0 // pred_region
    _
  $region5: #{convnet_forward.1} parent=0 // pred_fallthru
    _
  // Predicated region
  $region6: #{convnet_forward.1} parent=0 // pred_check
    _
  $region7: #{convnet_forward.1} parent=0 // pred_check_branch
    %14 = sbr.rel (0) target = $region9
  $region8: #{convnet_forward.1} parent=0 // pred_region
    _
  $region9: #{convnet_forward.1} parent=0 // pred_fallthru
    _
  // Predicated region
  $region10: #{convnet_forward.1} parent=0 // pred_check
    _
  $region11: #{convnet_forward.1} parent=0 // pred_check_branch
    %16 = sbr.rel (0) target = $region13
  $region12: #{convnet_forward.1} parent=0 // pred_region
    _
  $region13: #{convnet_forward.1} parent=0 // pred_fallthru
    _
  // Predicated region
  $region14: #{convnet_forward.1} parent=0 // pred_check
    _
  $region15: #{convnet_forward.1} parent=0 // pred_check_branch
    %18 = sbr.rel (0) target = $region17
  $region16: #{convnet_forward.1} parent=0 // pred_region
    _
  $region17: #{convnet_forward.1} parent=0 // pred_fallthru
    _
  // Predicated region
  $region18: #{convnet_forward.1} parent=0 // pred_check
    _
  $region19: #{convnet_forward.1} parent=0 // pred_check_branch
    %20 = sbr.rel (0) target = $region21
  $region20: #{convnet_forward.1} parent=0 // pred_region
    _
  $region21: #{convnet_forward.1} parent=0 // pred_fallthru
    _
  // Predicated region
  $region22: #{convnet_forward.1} parent=0 // pred_check
    _
  $region23: #{convnet_forward.1} parent=0 // pred_check_branch
    %22 = sbr.rel (0) target = $region25
  $region24: #{convnet_forward.1} parent=0 // pred_region
    _
  $region25: #{convnet_forward.1} parent=0 // pred_fallthru
    _
  %v23 = vld [vmem:[%s0] sm:$0xff]
  %v24 = vld [vmem:[%s0 + $0x8] sm:$0xff]
  %v25 = vld [vmem:[%s0 + $0x10] sm:$0xff]
  %v26 = vld [vmem:[%s0 + $0x18] sm:$0xff]
  %v27 = vld [vmem:[%s0 + $0x20] sm:$0xff]
  %v28 = vld [vmem:[%s0 + $0x28] sm:$0xff]
  %v29 = vld [vmem:[%s0 + $0x30] sm:$0xff]
  %v30 = vld [vmem:[%s0 + $0x38] sm:$0xff]
  %v31 = vld [vmem:[%s0 + $0x40] sm:$0xff]
  %v32 = vld [vmem:[%s0 + $0x48] sm:$0xff]
  %v33 = vld [vmem:[%s0 + $0x50] sm:$0xff]
  %v34 = vld [vmem:[%s0 + $0x58] sm:$0xff]
  %v35 = vld [vmem:[%s0 + $0x60] sm:$0xff]
  %v36 = vld [vmem:[%s0 + $0x68] sm:$0xff]
  %v37 = vld [vmem:[%s0 + $0x70] sm:$0xff]
  %v38 = vld [vmem:[%s0 + $0x78] sm:$0xff]
  %vm55 = vcmask 1046528
  %v56 = vrot.slane %v23, 1
  %v57 = vrot.slane %v24, 1
  %v58 = vsel %vm55, %v56, %v57
  %v59 = vrot.slane %v25, 1
  %v60 = vrot.slane %v26, 1
  %v61 = vsel %vm55, %v59, %v60
  %v62 = vrot.slane %v27, 1
  %v63 = vrot.slane %v28, 1
  %v64 = vsel %vm55, %v62, %v63
  %v65 = vrot.slane %v29, 1
  %v66 = vrot.slane %v30, 1
  %v67 = vsel %vm55, %v65, %v66
  %v68 = vrot.slane %v31, 1
  %v69 = vrot.slane %v32, 1
  %v70 = vsel %vm55, %v68, %v69
  %v71 = vrot.slane %v33, 1
  %v72 = vrot.slane %v34, 1
  %v73 = vsel %vm55, %v71, %v72
  %v74 = vrot.slane %v35, 1
  %v75 = vrot.slane %v36, 1
  %v76 = vsel %vm55, %v74, %v75
  %v77 = vrot.slane %v37, 1
  %v78 = vrot.slane %v38, 1
  %v79 = vsel %vm55, %v77, %v78
  %80 = vrot.lane.b32.xlu0 %v58, 32
  %v81 = vpop.permute.xlu0 %80
  %82 = vrot.lane.b32.xlu0 %v61, 32
  %v83 = vpop.permute.xlu0 %82
  %84 = vrot.lane.b32.xlu0 %v64, 32
  %v85 = vpop.permute.xlu0 %84
  %86 = vrot.lane.b32.xlu0 %v67, 32
  %v87 = vpop.permute.xlu0 %86
  %88 = vrot.lane.b32.xlu0 %v70, 32
  %v89 = vpop.permute.xlu0 %88
  %90 = vrot.lane.b32.xlu0 %v73, 32
  %v91 = vpop.permute.xlu0 %90
  %92 = vrot.lane.b32.xlu0 %v76, 32
  %v93 = vpop.permute.xlu0 %92
  %94 = vrot.lane.b32.xlu0 %v79, 32
  %v95 = vpop.permute.xlu0 %94
  %vm104 = vcmask 1045504
  %v105 = vrot.slane %v23, 2
  %v106 = vrot.slane %v24, 2
  %v107 = vsel %vm104, %v105, %v106
  %v108 = vrot.slane %v25, 2
  %v109 = vrot.slane %v26, 2
  %v110 = vsel %vm104, %v108, %v109
  %v111 = vrot.slane %v27, 2
  %v112 = vrot.slane %v28, 2
  %v113 = vsel %vm104, %v111, %v112
  %v114 = vrot.slane %v29, 2
  %v115 = vrot.slane %v30, 2
  %v116 = vsel %vm104, %v114, %v115
  %v117 = vrot.slane %v31, 2
  %v118 = vrot.slane %v32, 2
  %v119 = vsel %vm104, %v117, %v118
  %v120 = vrot.slane %v33, 2
  %v121 = vrot.slane %v34, 2
  %v122 = vsel %vm104, %v120, %v121
  %v123 = vrot.slane %v35, 2
  %v124 = vrot.slane %v36, 2
  %v125 = vsel %vm104, %v123, %v124
  %v126 = vrot.slane %v37, 2
  %v127 = vrot.slane %v38, 2
  %v128 = vsel %vm104, %v126, %v127
  %129 = vrot.lane.b32.xlu0 %v107, 64
  %v130 = vpop.permute.xlu0 %129
  %131 = vrot.lane.b32.xlu0 %v110, 64
  %v132 = vpop.permute.xlu0 %131
  %133 = vrot.lane.b32.xlu0 %v113, 64
  %v134 = vpop.permute.xlu0 %133
  %135 = vrot.lane.b32.xlu0 %v116, 64
  %v136 = vpop.permute.xlu0 %135
  %137 = vrot.lane.b32.xlu0 %v119, 64
  %v138 = vpop.permute.xlu0 %137
  %139 = vrot.lane.b32.xlu0 %v122, 64
  %v140 = vpop.permute.xlu0 %139
  %141 = vrot.lane.b32.xlu0 %v125, 64
  %v142 = vpop.permute.xlu0 %141
  %143 = vrot.lane.b32.xlu0 %v128, 64
  %v144 = vpop.permute.xlu0 %143
  %vm153 = vcmask 1044480
  %v154 = vrot.slane %v23, 3
  %v155 = vrot.slane %v24, 3
  %v156 = vsel %vm153, %v154, %v155
  %v157 = vrot.slane %v25, 3
  %v158 = vrot.slane %v26, 3
  %v159 = vsel %vm153, %v157, %v158
  %v160 = vrot.slane %v27, 3
  %v161 = vrot.slane %v28, 3
  %v162 = vsel %vm153, %v160, %v161
  %v163 = vrot.slane %v29, 3
  %v164 = vrot.slane %v30, 3
  %v165 = vsel %vm153, %v163, %v164
  %v166 = vrot.slane %v31, 3
  %v167 = vrot.slane %v32, 3
  %v168 = vsel %vm153, %v166, %v167
  %v169 = vrot.slane %v33, 3
  %v170 = vrot.slane %v34, 3
  %v171 = vsel %vm153, %v169, %v170
  %v172 = vrot.slane %v35, 3
  %v173 = vrot.slane %v36, 3
  %v174 = vsel %vm153, %v172, %v173
  %v175 = vrot.slane %v37, 3
  %v176 = vrot.slane %v38, 3
  %v177 = vsel %vm153, %v175, %v176
  %178 = vrot.lane.b32.xlu0 %v156, 96
  %v179 = vpop.permute.xlu0 %178
  %180 = vrot.lane.b32.xlu0 %v159, 96
  %v181 = vpop.permute.xlu0 %180
  %182 = vrot.lane.b32.xlu0 %v162, 96
  %v183 = vpop.permute.xlu0 %182
  %184 = vrot.lane.b32.xlu0 %v165, 96
  %v185 = vpop.permute.xlu0 %184
  %186 = vrot.lane.b32.xlu0 %v168, 96
  %v187 = vpop.permute.xlu0 %186
  %188 = vrot.lane.b32.xlu0 %v171, 96
  %v189 = vpop.permute.xlu0 %188
  %190 = vrot.lane.b32.xlu0 %v174, 96
  %v191 = vpop.permute.xlu0 %190
  %192 = vrot.lane.b32.xlu0 %v177, 96
  %v193 = vpop.permute.xlu0 %192
  %vm202 = vcmask 261120
  %v203 = vsel %vm202, %v23, %v81
  %v204 = vsel %vm202, %v25, %v83
  %v205 = vsel %vm202, %v27, %v85
  %v206 = vsel %vm202, %v29, %v87
  %v207 = vsel %vm202, %v31, %v89
  %v208 = vsel %vm202, %v33, %v91
  %v209 = vsel %vm202, %v35, %v93
  %v210 = vsel %vm202, %v37, %v95
  %vm211 = vcmask 523264
  %v212 = vsel %vm211, %v203, %v130
  %v213 = vsel %vm211, %v204, %v132
  %v214 = vsel %vm211, %v205, %v134
  %v215 = vsel %vm211, %v206, %v136
  %v216 = vsel %vm211, %v207, %v138
  %v217 = vsel %vm211, %v208, %v140
  %v218 = vsel %vm211, %v209, %v142
  %v219 = vsel %vm211, %v210, %v144
  %vm220 = vcmask 785408
  %v221 = vsel %vm220, %v212, %v179
  %v222 = vsel %vm220, %v213, %v181
  %v223 = vsel %vm220, %v214, %v183
  %v224 = vsel %vm220, %v215, %v185
  %v225 = vsel %vm220, %v216, %v187
  %v226 = vsel %vm220, %v217, %v189
  %v227 = vsel %vm220, %v218, %v191
  %v228 = vsel %vm220, %v219, %v193
  %v229 = vld [vmem:[%s1] sm:$0xff]
  %v230 = vld [vmem:[%s1 + $0x8] sm:$0xff]
  %v231 = vld [vmem:[%s1 + $0x10] sm:$0xff]
  %v232 = vld [vmem:[%s1 + $0x18] sm:$0xff]
  %v233 = vld [vmem:[%s1 + $0x20] sm:$0xff]
  %v234 = vld [vmem:[%s1 + $0x28] sm:$0xff]
  %v235 = vld [vmem:[%s1 + $0x30] sm:$0xff]
  %v236 = vld [vmem:[%s1 + $0x38] sm:$0xff]
  %v237 = vld [vmem:[%s1 + $0x40] sm:$0xff]
  %v238 = vld [vmem:[%s1 + $0x48] sm:$0xff]
  %v239 = vld [vmem:[%s1 + $0x50] sm:$0xff]
  %v240 = vld [vmem:[%s1 + $0x58] sm:$0xff]
  %v241 = vld [vmem:[%s1 + $0x60] sm:$0xff]
  %v242 = vld [vmem:[%s1 + $0x68] sm:$0xff]
  %v243 = vld [vmem:[%s1 + $0x70] sm:$0xff]
  %v244 = vld [vmem:[%s1 + $0x78] sm:$0xff]
  %v245 = vld [vmem:[%s2] sm:$0x1]
  %v247 = vperm.slane %v245, 0
  %249 = vmatpush.msra.mxu0 %v244
  %250 = vmatpush.msra.mxu0 %v243
  %251 = vmatpush.msra.mxu0 %v242
  %252 = vmatpush.msra.mxu0 %v241
  %253 = vmatpush.msra.mxu0 %v240
  %254 = vmatpush.msra.mxu0 %v239
  %255 = vmatpush.msra.mxu0 %v238
  %256 = vmatpush.msra.mxu0 %v237
  %257 = vmatpush.msra.mxu0 %v236
  %258 = vmatpush.msra.mxu0 %v235
  %259 = vmatpush.msra.mxu0 %v234
  %260 = vmatpush.msra.mxu0 %v233
  %261 = vmatpush.msra.mxu0 %v232
  %262 = vmatpush.msra.mxu0 %v231
  %263 = vmatpush.msra.mxu0 %v230
  %264 = vmatpush.msra.mxu0 %v229
  %265 = vmatmul.f32.gmra.mxu0 %v221
  %v266 = vpop.f32.mrf.mxu0
  %v267 = vadd.f32 %v247, %v266
  %268 = vmatmul.f32.gmra.mxu0 %v222
  %v269 = vpop.f32.mrf.mxu0
  %v270 = vadd.f32 %v247, %v269
  %271 = vmatmul.f32.gmra.mxu0 %v223
  %v272 = vpop.f32.mrf.mxu0
  %v273 = vadd.f32 %v247, %v272
  %274 = vmatmul.f32.gmra.mxu0 %v224
  %v275 = vpop.f32.mrf.mxu0
  %v276 = vadd.f32 %v247, %v275
  %277 = vmatmul.f32.gmra.mxu0 %v225
  %v278 = vpop.f32.mrf.mxu0
  %v279 = vadd.f32 %v247, %v278
  %280 = vmatmul.f32.gmra.mxu0 %v226
  %v281 = vpop.f32.mrf.mxu0
  %v282 = vadd.f32 %v247, %v281
  %283 = vmatmul.f32.gmra.mxu0 %v227
  %v284 = vpop.f32.mrf.mxu0
  %v285 = vadd.f32 %v247, %v284
  %286 = vmatmul.f32.gmra.mxu0 %v228
  %v287 = vpop.f32.mrf.mxu0
  %v288 = vadd.f32 %v247, %v287
  %289 = vdwg.mxu0
  %v290 = vmax.f32 %v267, 0.0
  %v291 = vmax.f32 %v270, 0.0
  %v292 = vmax.f32 %v273, 0.0
  %v293 = vmax.f32 %v276, 0.0
  %v294 = vmax.f32 %v279, 0.0
  %v295 = vmax.f32 %v282, 0.0
  %v296 = vmax.f32 %v285, 0.0
  %v297 = vmax.f32 %v288, 0.0
  %v298 = vld [vmem:[%s3] sm:$0xff]
  %v299 = vmul.f32 %v290, %v298
  %v300 = vmul.f32 %v291, %v298
  %v301 = vmul.f32 %v292, %v298
  %v302 = vmul.f32 %v293, %v298
  %v303 = vmul.f32 %v294, %v298
  %v304 = vmul.f32 %v295, %v298
  %v305 = vmul.f32 %v296, %v298
  %v306 = vmul.f32 %v297, %v298
  %v307 = vrot.slane %v299, 4
  %v308 = vmax.f32 %v299, %v307
  %v309 = vrot.slane %v308, 2
  %v310 = vmax.f32 %v308, %v309
  %v311 = vrot.slane %v310, 1
  %v312 = vmax.f32 %v310, %v311
  %v313 = vrot.slane %v300, 4
  %v314 = vmax.f32 %v300, %v313
  %v315 = vrot.slane %v314, 2
  %v316 = vmax.f32 %v314, %v315
  %v317 = vrot.slane %v316, 1
  %v318 = vmax.f32 %v316, %v317
  %v319 = vrot.slane %v301, 4
  %v320 = vmax.f32 %v301, %v319
  %v321 = vrot.slane %v320, 2
  %v322 = vmax.f32 %v320, %v321
  %v323 = vrot.slane %v322, 1
  %v324 = vmax.f32 %v322, %v323
  %v325 = vrot.slane %v302, 4
  %v326 = vmax.f32 %v302, %v325
  %v327 = vrot.slane %v326, 2
  %v328 = vmax.f32 %v326, %v327
  %v329 = vrot.slane %v328, 1
  %v330 = vmax.f32 %v328, %v329
  %v331 = vrot.slane %v303, 4
  %v332 = vmax.f32 %v303, %v331
  %v333 = vrot.slane %v332, 2
  %v334 = vmax.f32 %v332, %v333
  %v335 = vrot.slane %v334, 1
  %v336 = vmax.f32 %v334, %v335
  %v337 = vrot.slane %v304, 4
  %v338 = vmax.f32 %v304, %v337
  %v339 = vrot.slane %v338, 2
  %v340 = vmax.f32 %v338, %v339
  %v341 = vrot.slane %v340, 1
  %v342 = vmax.f32 %v340, %v341
  %v343 = vrot.slane %v305, 4
  %v344 = vmax.f32 %v305, %v343
  %v345 = vrot.slane %v344, 2
  %v346 = vmax.f32 %v344, %v345
  %v347 = vrot.slane %v346, 1
  %v348 = vmax.f32 %v346, %v347
  %v349 = vrot.slane %v306, 4
  %v350 = vmax.f32 %v306, %v349
  %v351 = vrot.slane %v350, 2
  %v352 = vmax.f32 %v350, %v351
  %v353 = vrot.slane %v352, 1
  %v354 = vmax.f32 %v352, %v353
  %v355 = vld [vmem:[%s4] sm:$0xff]
  %v356 = vld [vmem:[%s4 + $0x8] sm:$0xff]
  %v357 = vld [vmem:[%s4 + $0x10] sm:$0xff]
  %v358 = vld [vmem:[%s4 + $0x18] sm:$0xff]
  %v359 = vld [vmem:[%s4 + $0x20] sm:$0xff]
  %v360 = vld [vmem:[%s4 + $0x28] sm:$0xff]
  %v361 = vld [vmem:[%s4 + $0x30] sm:$0xff]
  %v362 = vld [vmem:[%s4 + $0x38] sm:$0xff]
  %v363 = vld [vmem:[%s4 + $0x40] sm:$0xff]
  %v364 = vld [vmem:[%s4 + $0x48] sm:$0xff]
  %v365 = vld [vmem:[%s4 + $0x50] sm:$0xff]
  %v366 = vld [vmem:[%s4 + $0x58] sm:$0xff]
  %v367 = vld [vmem:[%s4 + $0x60] sm:$0xff]
  %v368 = vld [vmem:[%s4 + $0x68] sm:$0xff]
  %v369 = vld [vmem:[%s4 + $0x70] sm:$0xff]
  %v370 = vld [vmem:[%s4 + $0x78] sm:$0xff]
  %v371 = vld [vmem:[%s5] sm:$0x1]
  %v373 = vperm.slane %v371, 0
  %vm383 = vcmask 1041409
  %v384 = vsel %vm383, %v318, %v312
  %vm385 = vcmask 1042434
  %v386 = vsel %vm385, %v324, %v384
  %vm387 = vcmask 1043459
  %v388 = vsel %vm387, %v330, %v386
  %vm389 = vcmask 1044484
  %v390 = vsel %vm389, %v336, %v388
  %vm391 = vcmask 1045509
  %v392 = vsel %vm391, %v342, %v390
  %vm393 = vcmask 1046534
  %v394 = vsel %vm393, %v348, %v392
  %vm395 = vcmask 1047559
  %v396 = vsel %vm395, %v354, %v394
  %398 = vmatpush.msra.mxu0 %v370
  %399 = vmatpush.msra.mxu0 %v369
  %400 = vmatpush.msra.mxu0 %v368
  %401 = vmatpush.msra.mxu0 %v367
  %402 = vmatpush.msra.mxu0 %v366
  %403 = vmatpush.msra.mxu0 %v365
  %404 = vmatpush.msra.mxu0 %v364
  %405 = vmatpush.msra.mxu0 %v363
  %406 = vmatpush.msra.mxu0 %v362
  %407 = vmatpush.msra.mxu0 %v361
  %408 = vmatpush.msra.mxu0 %v360
  %409 = vmatpush.msra.mxu0 %v359
  %410 = vmatpush.msra.mxu0 %v358
  %411 = vmatpush.msra.mxu0 %v357
  %412 = vmatpush.msra.mxu0 %v356
  %413 = vmatpush.msra.mxu0 %v355
  %414 = vmatmul.f32.gmra.mxu0 %v396
  %v415 = vpop.f32.mrf.mxu0
  %v416 = vadd.f32 %v373, %v415
  %417 = vdwg.mxu0
  %418 = vmax.xlane.f32.xlu0 %v416
  %v419 = vpop.xlane.xlu0 %418
  %v420 = vsub.f32 %v416, %v419
  %v421 = vmul.f32 %v420, 1.442695
  %v422 = vpow.pop %v421
  %423 = vadd.xlane.f32.xlu0 %v422
  %v424 = vpop.xlane.xlu0 %423
  %v425 = vrcp.pop %v424
  %v426 = vmul.f32 %v422, %v425
  %427 = vst [vmem:[%s6] sm:$0xff] %v426
  // Predicated region
  $region26: #{convnet_forward.1} parent=0 // pred_check
    _
  $region27: #{convnet_forward.1} parent=0 // pred_check_branch
    %429 = sbr.rel (0) target = $region29
  $region28: #{convnet_forward.1} parent=0 // pred_region
    _
  $region29: #{convnet_forward.1} parent=0 // pred_fallthru
    _
  // Predicated region
  $region30: #{convnet_forward.1} parent=0 // pred_check
    _
  $region31: #{convnet_forward.1} parent=0 // pred_check_branch
    %431 = sbr.rel (0) target = $region33
  $region32: #{convnet_forward.1} parent=0 // pred_region
    _
  $region33: #{convnet_forward.1} parent=0 // pred_fallthru
    _

</llo_original>
